<compile_context>
chip_gen: v6e
topology: v6e:2x2x1
jax: 0.10.0
libtpu: 0.0.40
codegen_flags: <defaults>
</compile_context>

<pallas_src>
import jax
import jax.numpy as jnp
import numpy as np
from jax.experimental import pallas as pl
from jax.experimental.pallas import tpu as pltpu

_EPS = 1e-9
_LANES = 128
_MAX_BLOCK_ROWS = 2048     # 2048*128*4B = 1 MiB per input tile
_PAD_LOGIT = -1e30         # sigmoid -> 0, bce term -> 0 (with target 0)


def _bce_dice_partial_kernel(x_ref, t_ref, o_ref):
    x = x_ref[...].astype(jnp.float32)
    t = t_ref[...].astype(jnp.float32)

    # One transcendental per element, shared by BCE and sigmoid.
    e = jnp.exp(-jnp.abs(x))
    # Numerically-stable BCE-with-logits: max(x,0) - x*t + log(1 + exp(-|x|))
    bce = jnp.maximum(x, 0.0) - x * t + jnp.log1p(e)
    # sigmoid(x) = 1/(1+e) if x >= 0 else e/(1+e)
    p = jnp.where(x >= 0.0, 1.0, e) / (1.0 + e)

    def vreg_partial(v):
        # (block_rows, 128) -> (block_rows//8, 8, 128) -> sum leading axis:
        # pure full-vreg VPU adds; the cross-sublane/lane reduction happens
        # once in the wrapper epilogue, not per grid step.
        return jnp.sum(v.reshape(-1, 8, _LANES), axis=0)

    o_ref[0, 0] = vreg_partial(bce)
    o_ref[0, 1] = vreg_partial(p * t)
    o_ref[0, 2] = vreg_partial(p)
    o_ref[0, 3] = vreg_partial(t)


def bce_dice_loss(logits: jax.Array, targets: jax.Array) -> jax.Array:
    assert logits.shape == targets.shape
    n_valid = int(np.prod(logits.shape))

    # Keep native dtypes; cast to f32 inside the kernel (saves HBM bandwidth
    # for bf16/int inputs).
    x = logits.reshape(-1)
    t = targets.reshape(-1)

    rows = pl.cdiv(n_valid, _LANES)
    rows8 = ((rows + 7) // 8) * 8                   # (8,128) tiling constraint
    block_rows = min(_MAX_BLOCK_ROWS, rows8)        # multiple of 8 by construction
    grid_len = pl.cdiv(rows8, block_rows)
    padded_rows = grid_len * block_rows
    pad = padded_rows * _LANES - n_valid

    if pad:
        # Padded elements contribute exactly 0 to all four sums, so no mask
        # stream is needed.
        x = jnp.pad(x, (0, pad), constant_values=_PAD_LOGIT)
        t = jnp.pad(t, (0, pad), constant_values=0)

    x2 = x.reshape(padded_rows, _LANES)
    t2 = t.reshape(padded_rows, _LANES)

    in_spec = pl.BlockSpec((block_rows, _LANES), lambda i: (i, 0))
    out_spec = pl.BlockSpec((1, 4, 8, _LANES), lambda i: (i, 0, 0, 0))

    partials = pl.pallas_call(
        _bce_dice_partial_kernel,
        out_shape=jax.ShapeDtypeStruct((grid_len, 4, 8, _LANES), jnp.float32),
        grid_spec=pltpu.PrefetchScalarGridSpec(
            num_scalar_prefetch=0,
            grid=(grid_len,),
            in_specs=[in_spec, in_spec],
            out_specs=out_spec,
        ),
        compiler_params=pltpu.CompilerParams(
            dimension_semantics=("parallel",)
        ),
    )(x2, t2)

    # Tiny scalar epilogue (combines per-step / per-core partials).
    sums = jnp.sum(partials, axis=(0, 2, 3))        # (4,)
    bce_sum, pt_sum, p_sum, t_sum = sums[0], sums[1], sums[2], sums[3]

    bce_loss = bce_sum / jnp.float32(n_valid)
    dice_score = (2.0 * pt_sum + jnp.float32(_EPS)) / (p_sum + t_sum)
    return bce_loss + (1.0 - dice_score)


def _reference(logits, targets):
    x = logits.astype(jnp.float32).reshape(-1)
    t = targets.astype(jnp.float32).reshape(-1)
    bce = jnp.mean(jnp.maximum(x, 0.0) - x * t + jnp.log1p(jnp.exp(-jnp.abs(x))))
    p = jax.nn.sigmoid(x)
    intersection = 2.0 * jnp.sum(p * t)
    union = jnp.sum(p) + jnp.sum(t)
    dice = (intersection + _EPS) / union
    return bce + (1.0 - dice)


if __name__ == "__main__":
    key = jax.random.PRNGKey(0)
    k1, k2 = jax.random.split(key)
    # Shapes consistent with a segmentation head: (batch, channels, H, W)
    logits = jax.random.normal(k1, (2, 4, 16, 16), dtype=jnp.float32)
    targets = (jax.random.uniform(k2, (2, 4, 16, 16)) > 0.5).astype(jnp.float32)

    loss = bce_dice_loss(logits, targets)
    jax.block_until_ready(loss)

    ref = _reference(logits, targets)
    np.testing.assert_allclose(np.asarray(loss), np.asarray(ref), rtol=1e-5, atol=1e-5)
    print("KERNEL_OK")
</pallas_src>

<mosaic_0001>
module attributes {stable_mosaic.version = 11 : i64} {
  func.func @_bce_dice_partial_kernel(%arg0: i32, %arg1: memref<16x128xf32, #tpu.memory_space<vmem>>, %arg2: memref<16x128xf32, #tpu.memory_space<vmem>>, %arg3: memref<1x4x8x128xf32, #tpu.memory_space<vmem>>) attributes {dimension_semantics = [#tpu.dimension_semantics<parallel>], iteration_bounds = array<i64: 1>, scalar_prefetch = 0 : i64, scratch_operands = 0 : i64, tpu.core_type = #tpu.core_type<tc>, window_params = [{transform_indices = @transform_0, window_bounds = array<i64: 16, 128>}, {transform_indices = @transform_1, window_bounds = array<i64: 16, 128>}, {transform_indices = @transform_2, window_bounds = array<i64: 1, 4, 8, 128>}]} {
    %c0 = arith.constant 0 : index
    %c0_0 = arith.constant 0 : index
    %0 = vector.load %arg1[%c0, %c0_0] : memref<16x128xf32, #tpu.memory_space<vmem>>, vector<16x128xf32>
    %c0_1 = arith.constant 0 : index
    %c0_2 = arith.constant 0 : index
    %1 = vector.load %arg2[%c0_1, %c0_2] : memref<16x128xf32, #tpu.memory_space<vmem>>, vector<16x128xf32>
    %2 = math.absf %0 : vector<16x128xf32>
    %cst = arith.constant 0.000000e+00 : f32
    %3 = vector.broadcast %cst : f32 to vector<16x128xf32>
    %4 = arith.subf %3, %2 : vector<16x128xf32>
    %5 = math.exp %4 : vector<16x128xf32>
    %cst_3 = arith.constant 0.000000e+00 : f32
    %6 = vector.broadcast %cst_3 : f32 to vector<16x128xf32>
    %7 = arith.maximumf %0, %6 : vector<16x128xf32>
    %8 = arith.mulf %0, %1 : vector<16x128xf32>
    %9 = arith.subf %7, %8 : vector<16x128xf32>
    %10 = math.log1p %5 : vector<16x128xf32>
    %11 = arith.addf %9, %10 : vector<16x128xf32>
    %cst_4 = arith.constant 0.000000e+00 : f32
    %12 = vector.broadcast %cst_4 : f32 to vector<16x128xf32>
    %13 = arith.cmpf oge, %0, %12 : vector<16x128xf32>
    %cst_5 = arith.constant 1.000000e+00 : f32
    %14 = vector.broadcast %cst_5 : f32 to vector<16x128xf32>
    %15 = arith.select %13, %14, %5 : vector<16x128xi1>, vector<16x128xf32>
    %cst_6 = arith.constant 1.000000e+00 : f32
    %16 = vector.broadcast %cst_6 : f32 to vector<16x128xf32>
    %17 = arith.addf %16, %5 : vector<16x128xf32>
    %18 = arith.divf %15, %17 : vector<16x128xf32>
    %19 = vector.shape_cast %11 : vector<16x128xf32> to vector<2x8x128xf32>
    %cst_7 = arith.constant dense<0.000000e+00> : vector<8x128xf32>
    %20 = vector.multi_reduction <add>, %19, %cst_7 [0] : vector<2x8x128xf32> to vector<8x128xf32>
    %c0_8 = arith.constant 0 : index
    %c0_9 = arith.constant 0 : index
    %c0_10 = arith.constant 0 : index
    %c0_11 = arith.constant 0 : index
    %21 = vector.load %arg3[%c0_8, %c0_9, %c0_10, %c0_11] : memref<1x4x8x128xf32, #tpu.memory_space<vmem>>, vector<1x1x8x128xf32>
    %22 = vector.shape_cast %21 : vector<1x1x8x128xf32> to vector<8x128xf32>
    %23 = vector.shape_cast %20 : vector<8x128xf32> to vector<1x1x8x128xf32>
    tpu.vector_store %arg3[%c0_8, %c0_9, %c0_10, %c0_11], %23 {strides = array<i32>} : memref<1x4x8x128xf32, #tpu.memory_space<vmem>>, vector<1x1x8x128xf32>,
    %24 = arith.mulf %18, %1 : vector<16x128xf32>
    %25 = vector.shape_cast %24 : vector<16x128xf32> to vector<2x8x128xf32>
    %cst_12 = arith.constant dense<0.000000e+00> : vector<8x128xf32>
    %26 = vector.multi_reduction <add>, %25, %cst_12 [0] : vector<2x8x128xf32> to vector<8x128xf32>
    %c0_13 = arith.constant 0 : index
    %c1 = arith.constant 1 : index
    %c0_14 = arith.constant 0 : index
    %c0_15 = arith.constant 0 : index
    %27 = vector.load %arg3[%c0_13, %c1, %c0_14, %c0_15] : memref<1x4x8x128xf32, #tpu.memory_space<vmem>>, vector<1x1x8x128xf32>
    %28 = vector.shape_cast %27 : vector<1x1x8x128xf32> to vector<8x128xf32>
    %29 = vector.shape_cast %26 : vector<8x128xf32> to vector<1x1x8x128xf32>
    tpu.vector_store %arg3[%c0_13, %c1, %c0_14, %c0_15], %29 {strides = array<i32>} : memref<1x4x8x128xf32, #tpu.memory_space<vmem>>, vector<1x1x8x128xf32>,
    %30 = vector.shape_cast %18 : vector<16x128xf32> to vector<2x8x128xf32>
    %cst_16 = arith.constant dense<0.000000e+00> : vector<8x128xf32>
    %31 = vector.multi_reduction <add>, %30, %cst_16 [0] : vector<2x8x128xf32> to vector<8x128xf32>
    %c0_17 = arith.constant 0 : index
    %c2 = arith.constant 2 : index
    %c0_18 = arith.constant 0 : index
    %c0_19 = arith.constant 0 : index
    %32 = vector.load %arg3[%c0_17, %c2, %c0_18, %c0_19] : memref<1x4x8x128xf32, #tpu.memory_space<vmem>>, vector<1x1x8x128xf32>
    %33 = vector.shape_cast %32 : vector<1x1x8x128xf32> to vector<8x128xf32>
    %34 = vector.shape_cast %31 : vector<8x128xf32> to vector<1x1x8x128xf32>
    tpu.vector_store %arg3[%c0_17, %c2, %c0_18, %c0_19], %34 {strides = array<i32>} : memref<1x4x8x128xf32, #tpu.memory_space<vmem>>, vector<1x1x8x128xf32>,
    %35 = vector.shape_cast %1 : vector<16x128xf32> to vector<2x8x128xf32>
    %cst_20 = arith.constant dense<0.000000e+00> : vector<8x128xf32>
    %36 = vector.multi_reduction <add>, %35, %cst_20 [0] : vector<2x8x128xf32> to vector<8x128xf32>
    %c0_21 = arith.constant 0 : index
    %c3 = arith.constant 3 : index
    %c0_22 = arith.constant 0 : index
    %c0_23 = arith.constant 0 : index
    %37 = vector.load %arg3[%c0_21, %c3, %c0_22, %c0_23] : memref<1x4x8x128xf32, #tpu.memory_space<vmem>>, vector<1x1x8x128xf32>
    %38 = vector.shape_cast %37 : vector<1x1x8x128xf32> to vector<8x128xf32>
    %39 = vector.shape_cast %36 : vector<8x128xf32> to vector<1x1x8x128xf32>
    tpu.vector_store %arg3[%c0_21, %c3, %c0_22, %c0_23], %39 {strides = array<i32>} : memref<1x4x8x128xf32, #tpu.memory_space<vmem>>, vector<1x1x8x128xf32>,
    return
  }
  func.func @transform_0(%arg0: i32) -> (i32, i32) {
    %c0_i32 = arith.constant 0 : i32
    %c0_i32_0 = arith.constant 0 : i32
    return %arg0, %c0_i32 : i32, i32
  }
  func.func @transform_1(%arg0: i32) -> (i32, i32) {
    %c0_i32 = arith.constant 0 : i32
    %c0_i32_0 = arith.constant 0 : i32
    return %arg0, %c0_i32 : i32, i32
  }
  func.func @transform_2(%arg0: i32) -> (i32, i32, i32, i32) {
    %c0_i32 = arith.constant 0 : i32
    %c0_i32_0 = arith.constant 0 : i32
    %c0_i32_1 = arith.constant 0 : i32
    %c0_i32_2 = arith.constant 0 : i32
    return %arg0, %c0_i32, %c0_i32_0, %c0_i32_1 : i32, i32, i32, i32
  }
}

</mosaic_0001>

<llo_original>
// kernel: tpu_custom_call.1
$region0: #{tpu_custom_call.1}
  #allocation0 [shape = 'u32[]', space=smem, size = 0x4, offset = 0x4, fixed_abs, tag = 'smem constant byte address 0x4 - core index']
  #allocation1 [shape = 'u32[144,128]{1,0:T(1,128)}', space=vmem, size = 0x12000, scoped, tag = 'internal scratch']
  %s0 = inlined_call_operand.hbm [shape: f32[16,128], index: 0, kind: input, shape index: {}]
  %s1 = inlined_call_operand.hbm [shape: f32[16,128], index: 1, kind: input, shape index: {}]
  %s2 = inlined_call_operand.hbm [shape: f32[1,4,8,128], index: 2, kind: output, shape index: {}]
  %s3 = sld [smem:[#allocation0]]
  $region26: #{tpu_custom_call.1} parent=0
    _
  %s5 = ssub.s32 1, %s3
  %s6 = scalar_select 0, %s5, %s3
  $region1: #{tpu_custom_call.1} parent=0
    #allocation2 [shape = 'u8[8192]{0}', space=vmem, size = 0x2000, scoped, tag = 'input window, operand 0, single buffered']
    #allocation3 [shape = 's32[1]{0}', space=sflag, size = 0x4, scoped, tag = 'scoped memory for tpu_custom_call.1']
    #allocation4 [shape = 's32[1]{0}', space=sflag, size = 0x4, scoped, tag = 'scoped memory for tpu_custom_call.1']
    #allocation5 [shape = 'u8[8192]{0}', space=vmem, size = 0x2000, scoped, tag = 'input window, operand 1, single buffered']
    #allocation6 [shape = 's32[1]{0}', space=sflag, size = 0x4, scoped, tag = 'scoped memory for tpu_custom_call.1']
    #allocation7 [shape = 'u8[16384]{0}', space=vmem, size = 0x4000, scoped, tag = 'output window, operand 0, single buffered']
    %7 = vsyncpa [#allocation3], 0
    %8 = vsyncpa [#allocation6], 0
    %9 = vsyncpa [#allocation4], 0
    // Predicated region
    $region2: #{tpu_custom_call.1} parent=1 // pred_check
      _
    $region3: #{tpu_custom_call.1} parent=1 // pred_check_branch
      %11 = sbr.rel (0) target = $region5
    $region4: #{tpu_custom_call.1} parent=1 // pred_region
      %s13 = ssub.s32 256, 256
      %14 = vsyncadd [#allocation3], %s13
      %s15 = sshll.u32 [#allocation2], 4
      %s16 = int_to_ptr.vmem [resolvable:$true] %s15
      %21 = dma.hbm_to_vmem [thread:$0]  %s0, 256, %s16, [#allocation3], 128, 128, 8
    $region5: #{tpu_custom_call.1} parent=1 // pred_fallthru
      _
    // Predicated region
    $region6: #{tpu_custom_call.1} parent=1 // pred_check
      _
    $region7: #{tpu_custom_call.1} parent=1 // pred_check_branch
      %23 = sbr.rel (0) target = $region9
    $region8: #{tpu_custom_call.1} parent=1 // pred_region
      %s25 = ssub.s32 256, 256
      %26 = vsyncadd [#allocation6], %s25
      %s27 = sshll.u32 [#allocation5], 4
      %s28 = int_to_ptr.vmem [resolvable:$true] %s27
      %33 = dma.hbm_to_vmem [thread:$0]  %s1, 256, %s28, [#allocation6], 128, 128, 8
    $region9: #{tpu_custom_call.1} parent=1 // pred_fallthru
      _
    // Predicated region
    $region10: #{tpu_custom_call.1} parent=1 // pred_check
      _
    $region11: #{tpu_custom_call.1} parent=1 // pred_check_branch
      %35 = sbr.rel (0) target = $region13
    $region12: #{tpu_custom_call.1} parent=1 // pred_region
      %36 = dma.done [#allocation3], 256
    $region13: #{tpu_custom_call.1} parent=1 // pred_fallthru
      _
    // Predicated region
    $region14: #{tpu_custom_call.1} parent=1 // pred_check
      _
    $region15: #{tpu_custom_call.1} parent=1 // pred_check_branch
      %38 = sbr.rel (0) target = $region17
    $region16: #{tpu_custom_call.1} parent=1 // pred_region
      %39 = dma.done [#allocation6], 256
    $region17: #{tpu_custom_call.1} parent=1 // pred_fallthru
      _
    %v40 = vld [vmem:[#allocation2] sm:$0xff]
    %v41 = vld [vmem:[#allocation2 + $0x8] sm:$0xff]
    %v42 = vld [vmem:[#allocation5] sm:$0xff]
    %v43 = vld [vmem:[#allocation5 + $0x8] sm:$0xff]
    %v44 = vand.u32 2147483647, %v40
    %v45 = vand.u32 2147483647, %v41
    %v46 = vsub.f32 0.0, %v44
    %v47 = vsub.f32 0.0, %v45
    %v48 = vmul.f32 %v46, 1.442695
    %v49 = vpow.pop %v48
    %v50 = vmul.f32 %v47, 1.442695
    %v51 = vpow.pop %v50
    %v52 = vmax.f32 %v40, 0.0
    %v53 = vmax.f32 %v41, 0.0
    %v54 = vmul.f32 %v40, %v42
    %v55 = vmul.f32 %v41, %v43
    %v56 = vsub.f32 %v52, %v54
    %v57 = vsub.f32 %v53, %v55
    %v58 = vadd.f32 %v49, 1.0
    %v59 = vlog2.pop %v58
    %v60 = vmul.f32 %v59, 0.6931472
    %v61 = vmul.f32 -0.5, %v49
    %v62 = vadd.f32 %v61, 1.0
    %v63 = vmul.f32 %v62, %v49
    %v64 = vand.u32 2147483647, %v49
    %vm65 = vcmp.lt.f32.partialorder %v64, 0.0004427343
    %v66 = vsel %vm65, %v63, %v60
    %v67 = vadd.f32 %v51, 1.0
    %v68 = vlog2.pop %v67
    %v69 = vmul.f32 %v68, 0.6931472
    %v70 = vmul.f32 -0.5, %v51
    %v71 = vadd.f32 %v70, 1.0
    %v72 = vmul.f32 %v71, %v51
    %v73 = vand.u32 2147483647, %v51
    %vm74 = vcmp.lt.f32.partialorder %v73, 0.0004427343
    %v75 = vsel %vm74, %v72, %v69
    %v76 = vadd.f32 %v56, %v66
    %v77 = vadd.f32 %v57, %v75
    %vm78 = vcmp.ge.f32.partialorder %v40, 0.0
    %vm79 = vcmp.ge.f32.partialorder %v41, 0.0
    %v80 = vsel %vm78, 1.0, %v49
    %v81 = vsel %vm79, 1.0, %v51
    %v82 = vadd.f32 %v49, 1.0
    %v83 = vadd.f32 %v51, 1.0
    %v84 = vrcp.pop %v82
    %v85 = vmul.f32 %v80, %v84
    %v86 = vrcp.pop %v83
    %v87 = vmul.f32 %v81, %v86
    %v88 = vadd.f32 %v76, %v77
    %89 = vst [vmem:[#allocation7] sm:$0xff] %v88
    %v90 = vmul.f32 %v85, %v42
    %v91 = vmul.f32 %v87, %v43
    %v92 = vadd.f32 %v90, %v91
    %s93 = scalar_lea.vmem [#allocation7], 8
    %94 = vst [vmem:[%s93] sm:$0xff] %v92
    %v95 = vadd.f32 %v85, %v87
    %s96 = scalar_lea.vmem [#allocation7], 16
    %97 = vst [vmem:[%s96] sm:$0xff] %v95
    %v98 = vadd.f32 %v42, %v43
    %s99 = scalar_lea.vmem [#allocation7], 24
    %100 = vst [vmem:[%s99] sm:$0xff] %v98
    // Predicated region
    $region18: #{tpu_custom_call.1} parent=1 // pred_check
      _
    $region19: #{tpu_custom_call.1} parent=1 // pred_check_branch
      %102 = sbr.rel (0) target = $region21
    $region20: #{tpu_custom_call.1} parent=1 // pred_region
      %s104 = ssub.s32 512, 512
      %105 = vsyncadd [#allocation4], %s104
      %s106 = sshll.u32 [#allocation7], 4
      %s107 = int_to_ptr.vmem [resolvable:$true] %s106
      %112 = dma.vmem_to_hbm [thread:$0]  %s107, 512, %s2, [#allocation4], 128, 128, 8
    $region21: #{tpu_custom_call.1} parent=1 // pred_fallthru
      _
    // Predicated region
    $region22: #{tpu_custom_call.1} parent=1 // pred_check
      _
    $region23: #{tpu_custom_call.1} parent=1 // pred_check_branch
      %114 = sbr.rel (0) target = $region25
    $region24: #{tpu_custom_call.1} parent=1 // pred_region
      %115 = dma.done [#allocation4], 512
    $region25: #{tpu_custom_call.1} parent=1 // pred_fallthru
      _
    %116 = vsyncpa [#allocation3], 1
    %117 = vsyncpa [#allocation6], 1
    %118 = vsyncpa [#allocation4], 1

</llo_original>
